<compile_context>
chip_gen: v5e
topology: v5e:2x2
jax: 0.10.0
libtpu: 0.0.40
codegen_flags: <defaults>
</compile_context>

<pallas_src>
import functools

import jax
import jax.numpy as jnp
import numpy as np
from jax.experimental import pallas as pl
from jax.experimental.pallas import tpu as pltpu


# ----------------------------------------------------------------------------
# Kernel: fused point-MLP tower + max-pool over points, tiled along N
# ----------------------------------------------------------------------------
def _tower_kernel(n_total, tile_n, cin, chunk_c, last_relu,
                  x_ref, w1_ref, b1_ref, w2_ref, b2_ref, w3_ref, b3_ref,
                  out_ref, tmax_ref):
    """One (batch, N-tile) grid step.

    x:(1,tile_n,cin) bf16, w1:(1,cin,64) f32 (trans pre-folded where applicable),
    b*:(1,C) f32, w2:(64,128) bf16, w3:(128,1024) bf16  ->  out:(1,1,1024) f32
    (running max across the N-tile grid axis).  tmax_ref:(1,1024) f32 VMEM scratch.
    """
    t = pl.program_id(1)
    n_tiles = pl.num_programs(1)

    # --- layer 1: K = cin (tiny) -> VPU broadcast-FMA, keep the MXU for the big dims.
    x = x_ref[0].astype(jnp.float32)                    # (tile_n, cin)
    w1 = w1_ref[0]                                      # (cin, 64) f32
    h = x[:, 0:1] * w1[0:1, :]
    for c in range(1, cin):
        h = h + x[:, c:c + 1] * w1[c:c + 1, :]
    h = jnp.maximum(h + b1_ref[...], 0.0)               # (tile_n, 64) f32

    # --- layer 2 on the MXU (bf16 inputs, f32 accumulation).
    h = jnp.maximum(
        jnp.dot(h.astype(jnp.bfloat16), w2_ref[...],
                preferred_element_type=jnp.float32) + b2_ref[...], 0.0)   # (tile_n, 128)
    h2 = h.astype(jnp.bfloat16)

    cout = w3_ref.shape[1]
    partial = (n_total % tile_n) != 0                   # static: only last tile can be ragged
    if partial:
        rows = jax.lax.broadcasted_iota(jnp.int32, (tile_n, 1), 0)
        row_ok = rows < (n_total - t * tile_n)          # (tile_n, 1); cheap to build
        is_last = t == n_tiles - 1

    # --- layer 3 on the MXU, chunked over output columns; fold the row-max per chunk.
    #     Bias/relu are commuted past the max (applied on the (1,cout) tile max below).
    for ci in range(0, cout, chunk_c):
        cw = min(chunk_c, cout - ci)
        chunk = jnp.dot(h2, w3_ref[:, ci:ci + cw],
                        preferred_element_type=jnp.float32)               # (tile_n, cw)
        if partial:
            @pl.when(is_last)
            def _(chunk=chunk, ci=ci, cw=cw):
                masked = jnp.where(row_ok, chunk, -jnp.inf)
                tmax_ref[0:1, ci:ci + cw] = jnp.max(masked, axis=0, keepdims=True)

            @pl.when(t < n_tiles - 1)
            def _(chunk=chunk, ci=ci, cw=cw):
                tmax_ref[0:1, ci:ci + cw] = jnp.max(chunk, axis=0, keepdims=True)
        else:
            tmax_ref[0:1, ci:ci + cw] = jnp.max(chunk, axis=0, keepdims=True)

    # --- epilogue on the tiny (1, cout) tile max: +b3, optional relu (exact commute).
    tile_max = tmax_ref[...] + b3_ref[...]
    if last_relu:
        tile_max = jnp.maximum(tile_max, 0.0)

    # torch.max(x, 2): running max over the points axis, resident in out_ref.
    @pl.when(t == 0)
    def _():
        out_ref[0] = tile_max

    @pl.when(t > 0)
    def _():
        out_ref[0] = jnp.maximum(out_ref[0], tile_max)


# ----------------------------------------------------------------------------
# pallas_call wrapper
# ----------------------------------------------------------------------------
def point_tower(x_pts, w1, b1, w2, b2, w3, b3, *, last_relu,
                tile_n=2048, chunk_c=256):
    """x_pts: (B, N, Cin) bf16;  w1: (1, Cin, 64) shared or (B, Cin, 64) per-batch f32;
    b*: (1, C) f32;  w2/w3: bf16.  Returns max over points of the MLP: (B, Cout) f32."""
    B, N, Cin = x_pts.shape
    Cout = w3.shape[1]

    tile_n = min(tile_n, N)                 # full-N block if N is small
    if tile_n != N:
        # (8,128) rule: second-to-last block dim must be a multiple of 8 (or == N).
        tile_n = max(8, (tile_n // 8) * 8)
    n_tiles = pl.cdiv(N, tile_n)
    chunk_c = min(chunk_c, Cout)

    kernel = functools.partial(_tower_kernel, N, tile_n, Cin, chunk_c, last_relu)

    # Shared w1 -> always block (0,0,0); per-batch (trans-folded) w1 -> block (b,0,0).
    if w1.shape[0] == 1:
        w1_map = lambda b, t: (0, 0, 0)
    else:
        w1_map = lambda b, t: (b, 0, 0)

    out = pl.pallas_call(
        kernel,
        out_shape=jax.ShapeDtypeStruct((B, 1, Cout), jnp.float32),
        grid=(B, n_tiles),
        in_specs=[
            pl.BlockSpec((1, tile_n, Cin), lambda b, t: (b, t, 0)),            # x
            pl.BlockSpec((1, Cin, w1.shape[2]), w1_map),                       # w1
            pl.BlockSpec(b1.shape, lambda b, t: (0, 0)),                       # b1
            pl.BlockSpec(w2.shape, lambda b, t: (0, 0)),                       # w2
            pl.BlockSpec(b2.shape, lambda b, t: (0, 0)),                       # b2
            pl.BlockSpec(w3.shape, lambda b, t: (0, 0)),                       # w3
            pl.BlockSpec(b3.shape, lambda b, t: (0, 0)),                       # b3
        ],
        out_specs=pl.BlockSpec((1, 1, Cout), lambda b, t: (b, 0, 0)),
        scratch_shapes=[pltpu.VMEM((1, Cout), jnp.float32)],                   # per-tile max
        compiler_params=pltpu.CompilerParams(
            dimension_semantics=("parallel", "arbitrary"),
            vmem_limit_bytes=48 << 20),
    )(x_pts, w1, b1, w2, b2, w3, b3)
    return out[:, 0, :]                                                        # (B, Cout)


# ----------------------------------------------------------------------------
# Parameter construction (deterministic, synthetic; BN folded in inference mode)
# ----------------------------------------------------------------------------
def _dense(key, cin, cout, scale=0.1):
    kw, kb = jax.random.split(key)
    w = scale * jax.random.normal(kw, (cin, cout), dtype=jnp.float32)
    b = scale * jax.random.normal(kb, (cout,), dtype=jnp.float32)
    return w, b


def _bn(key, c):
    kg, kb = jax.random.split(key)
    gamma = 1.0 + 0.1 * jax.random.normal(kg, (c,), dtype=jnp.float32)
    beta = 0.1 * jax.random.normal(kb, (c,), dtype=jnp.float32)
    mean = jnp.zeros((c,), jnp.float32)
    var = jnp.ones((c,), jnp.float32)
    return gamma, beta, mean, var


def _fold_bn(w, b, bn, eps=1e-5):
    gamma, beta, mean, var = bn
    s = gamma / jnp.sqrt(var + eps)
    return w * s[None, :], (b - mean) * s + beta


def init_params(key, channel=2):
    ks = jax.random.split(key, 17)

    def conv_bn(kc, kb, cin, cout, wdtype=jnp.float32):
        w, b = _dense(kc, cin, cout)
        w, b = _fold_bn(w, b, _bn(kb, cout))
        return w.astype(wdtype), b.reshape(1, cout).astype(jnp.float32)

    # Towers: first-layer weight stays f32 (folded with trans / used on VPU),
    # the big MXU weights are bf16, biases f32.
    stn_tower = (*conv_bn(ks[0], ks[1], channel, 64),
                 *conv_bn(ks[2], ks[3], 64, 128, jnp.bfloat16),
                 *conv_bn(ks[4], ks[5], 128, 1024, jnp.bfloat16))

    # STN2 head (plain jnp in the wrapper): fc1+bn4, fc2+bn5, fc3 (+ identity), all f32.
    fw1, fb1 = conv_bn(ks[6], ks[7], 1024, 512)
    fw2, fb2 = conv_bn(ks[8], ks[9], 512, 256)
    fw3, fb3 = _dense(ks[10], 256, channel * channel)
    iden = jnp.eye(channel, dtype=jnp.float32).reshape(1, channel * channel)
    stn_head_p = (fw1, fb1, fw2, fb2, fw3, fb3.reshape(1, -1), iden)

    enc_tower = (*conv_bn(ks[11], ks[12], channel, 64),
                 *conv_bn(ks[13], ks[14], 64, 128, jnp.bfloat16),
                 *conv_bn(ks[15], ks[16], 128, 1024, jnp.bfloat16))

    return {"stn_tower": stn_tower, "stn_head": stn_head_p, "enc_tower": enc_tower}


# ----------------------------------------------------------------------------
# Forward (glue)
# ----------------------------------------------------------------------------
def pointnet_encoder_forward(x, params, *, tile_n=2048):
    """x: (B, D, N) in PyTorch NCW layout.  Returns (global_feat (B,1024), trans_feat=None)."""
    B, D, N = x.shape
    x_pts = jnp.transpose(x, (0, 2, 1))                       # (B, N, D) f32
    x_bf = x_pts.astype(jnp.bfloat16)

    # trans = STN2(x): point tower in Pallas, tiny FC head in plain jnp.
    w1, b1, w2, b2, w3, b3 = params["stn_tower"]
    g = point_tower(x_bf, w1[None], b1, w2, b2, w3, b3,
                    last_relu=True, tile_n=tile_n)            # (B, 1024); w1 shared (1,Cin,64)

    fw1, fb1, fw2, fb2, fw3, fb3, iden = params["stn_head"]
    h = jax.nn.relu(g @ fw1 + fb1)
    h = jax.nn.relu(h @ fw2 + fb2)
    trans = (h @ fw3 + fb3 + iden).reshape(B, D, D)            # (B, D, D)

    # Encoder tower with trans folded into conv1: (x @ trans) @ w1 == x @ (trans @ w1).
    ew1, eb1, ew2, eb2, ew3, eb3 = params["enc_tower"]
    ew1b = jnp.einsum("bij,jk->bik", trans, ew1)               # (B, D, 64), tiny per-batch fold
    feat = point_tower(x_bf, ew1b, eb1, ew2, eb2, ew3, eb3,
                       last_relu=False, tile_n=tile_n)         # (B, 1024)
    return feat, None


# ----------------------------------------------------------------------------
# Pure-JAX (f32) reference for verification
# ----------------------------------------------------------------------------
def reference_forward(x, params):
    B, D, _ = x.shape
    x_pts = jnp.transpose(x, (0, 2, 1))

    def tower(xp, ws, last_relu):
        w1, b1, w2, b2, w3, b3 = ws
        h = jax.nn.relu(xp @ w1.astype(jnp.float32) + b1)
        h = jax.nn.relu(h @ w2.astype(jnp.float32) + b2)
        h = h @ w3.astype(jnp.float32) + b3
        if last_relu:
            h = jax.nn.relu(h)
        return jnp.max(h, axis=1)

    g = tower(x_pts, params["stn_tower"], True)
    fw1, fb1, fw2, fb2, fw3, fb3, iden = params["stn_head"]
    h = jax.nn.relu(g @ fw1 + fb1)
    h = jax.nn.relu(h @ fw2 + fb2)
    trans = (h @ fw3 + fb3 + iden).reshape(B, D, D)
    xt = jnp.einsum("bnc,bck->bnk", x_pts, trans)
    return tower(xt, params["enc_tower"], False)


if __name__ == "__main__":
    key = jax.random.PRNGKey(0)
    kx, kx2, kp = jax.random.split(key, 3)

    # channel=2 so that STN2 (k=2) matches the input (required for the module to run).
    B, C, N = 2, 2, 16
    x = jax.random.normal(kx, (B, C, N), dtype=jnp.float32)
    params = init_params(kp, channel=C)

    feat, trans_feat = pointnet_encoder_forward(x, params)
    feat = jax.block_until_ready(feat)
    assert feat.shape == (B, 1024) and trans_feat is None
    ref = reference_forward(x, params)
    np.testing.assert_allclose(np.asarray(feat), np.asarray(ref), rtol=2e-2, atol=2e-2)

    # Exercise the tiled points axis: multiple N-tiles + masked partial last tile
    # (pl.when-gated fast path on interior tiles).
    N2 = 20
    x2 = jax.random.normal(kx2, (B, C, N2), dtype=jnp.float32)
    feat2, _ = pointnet_encoder_forward(x2, params, tile_n=8)
    feat2 = jax.block_until_ready(feat2)
    np.testing.assert_allclose(np.asarray(feat2),
                               np.asarray(reference_forward(x2, params)),
                               rtol=2e-2, atol=2e-2)

    print("KERNEL_OK")
</pallas_src>

<mosaic_0001>
module attributes {stable_mosaic.version = 11 : i64} {
  func.func @_tower_kernel(%arg0: i32, %arg1: i32, %arg2: memref<1x16x2xbf16, #tpu.memory_space<vmem>>, %arg3: memref<1x2x64xf32, #tpu.memory_space<vmem>>, %arg4: memref<1x64xf32, #tpu.memory_space<vmem>>, %arg5: memref<64x128xbf16, #tpu.memory_space<vmem>>, %arg6: memref<1x128xf32, #tpu.memory_space<vmem>>, %arg7: memref<128x1024xbf16, #tpu.memory_space<vmem>>, %arg8: memref<1x1024xf32, #tpu.memory_space<vmem>>, %arg9: memref<1x1x1024xf32, #tpu.memory_space<vmem>>, %arg10: memref<1x1024xf32, #tpu.memory_space<vmem>>) attributes {dimension_semantics = [#tpu.dimension_semantics<parallel>, #tpu.dimension_semantics<arbitrary>], iteration_bounds = array<i64: 2, 1>, scalar_prefetch = 0 : i64, scratch_operands = 1 : i64, tpu.core_type = #tpu.core_type<tc>, window_params = [{transform_indices = @transform_0, window_bounds = array<i64: 1, 16, 2>}, {pipeline_mode = #tpu.pipeline_mode<synchronous>, transform_indices = @transform_1, window_bounds = array<i64: 1, 2, 64>}, {pipeline_mode = #tpu.pipeline_mode<synchronous>, transform_indices = @transform_2, window_bounds = array<i64: 1, 64>}, {pipeline_mode = #tpu.pipeline_mode<synchronous>, transform_indices = @transform_3, window_bounds = array<i64: 64, 128>}, {pipeline_mode = #tpu.pipeline_mode<synchronous>, transform_indices = @transform_4, window_bounds = array<i64: 1, 128>}, {pipeline_mode = #tpu.pipeline_mode<synchronous>, transform_indices = @transform_5, window_bounds = array<i64: 128, 1024>}, {pipeline_mode = #tpu.pipeline_mode<synchronous>, transform_indices = @transform_6, window_bounds = array<i64: 1, 1024>}, {transform_indices = @transform_7, window_bounds = array<i64: 1, 1, 1024>}]} {
    %c0 = arith.constant 0 : index
    %c0_0 = arith.constant 0 : index
    %c0_1 = arith.constant 0 : index
    %0 = vector.load %arg2[%c0, %c0_0, %c0_1] : memref<1x16x2xbf16, #tpu.memory_space<vmem>>, vector<1x16x2xbf16>
    %1 = vector.shape_cast %0 : vector<1x16x2xbf16> to vector<16x2xbf16>
    %2 = arith.extf %1 : vector<16x2xbf16> to vector<16x2xf32>
    %c0_2 = arith.constant 0 : index
    %c0_3 = arith.constant 0 : index
    %c0_4 = arith.constant 0 : index
    %3 = vector.load %arg3[%c0_2, %c0_3, %c0_4] : memref<1x2x64xf32, #tpu.memory_space<vmem>>, vector<1x2x64xf32>
    %4 = vector.shape_cast %3 : vector<1x2x64xf32> to vector<2x64xf32>
    %5 = vector.extract_strided_slice %2 {offsets = [0, 0], sizes = [16, 1], strides = [1, 1]} : vector<16x2xf32> to vector<16x1xf32>
    %6 = vector.extract_strided_slice %4 {offsets = [0, 0], sizes = [1, 64], strides = [1, 1]} : vector<2x64xf32> to vector<1x64xf32>
    %7 = vector.broadcast %5 : vector<16x1xf32> to vector<16x64xf32>
    %8 = vector.broadcast %6 : vector<1x64xf32> to vector<16x64xf32>
    %9 = arith.mulf %7, %8 : vector<16x64xf32>
    %10 = vector.extract_strided_slice %2 {offsets = [0, 1], sizes = [16, 1], strides = [1, 1]} : vector<16x2xf32> to vector<16x1xf32>
    %11 = vector.extract_strided_slice %4 {offsets = [1, 0], sizes = [1, 64], strides = [1, 1]} : vector<2x64xf32> to vector<1x64xf32>
    %12 = vector.broadcast %10 : vector<16x1xf32> to vector<16x64xf32>
    %13 = vector.broadcast %11 : vector<1x64xf32> to vector<16x64xf32>
    %14 = arith.mulf %12, %13 : vector<16x64xf32>
    %15 = arith.addf %9, %14 : vector<16x64xf32>
    %c0_5 = arith.constant 0 : index
    %c0_6 = arith.constant 0 : index
    %16 = vector.load %arg4[%c0_5, %c0_6] : memref<1x64xf32, #tpu.memory_space<vmem>>, vector<1x64xf32>
    %17 = vector.broadcast %16 : vector<1x64xf32> to vector<16x64xf32>
    %18 = arith.addf %15, %17 : vector<16x64xf32>
    %cst = arith.constant 0.000000e+00 : f32
    %19 = vector.broadcast %cst : f32 to vector<16x64xf32>
    %20 = arith.maximumf %18, %19 : vector<16x64xf32>
    %21 = arith.truncf %20 : vector<16x64xf32> to vector<16x64xbf16>
    %c0_7 = arith.constant 0 : index
    %c0_8 = arith.constant 0 : index
    %22 = vector.load %arg5[%c0_7, %c0_8] : memref<64x128xbf16, #tpu.memory_space<vmem>>, vector<64x128xbf16>
    %cst_9 = arith.constant dense<0.000000e+00> : vector<16x128xf32>
    %23 = tpu.matmul %21, %22, %cst_9 {dimension_numbers = #tpu.dot_dimension_numbers<[1], [0], [0], [1], [0, 0, 1, 1], [], []>} : vector<16x64xbf16>, vector<64x128xbf16>, vector<16x128xf32> -> vector<16x128xf32>
    %c0_10 = arith.constant 0 : index
    %c0_11 = arith.constant 0 : index
    %24 = vector.load %arg6[%c0_10, %c0_11] : memref<1x128xf32, #tpu.memory_space<vmem>>, vector<1x128xf32>
    %25 = vector.broadcast %24 : vector<1x128xf32> to vector<16x128xf32>
    %26 = arith.addf %23, %25 : vector<16x128xf32>
    %cst_12 = arith.constant 0.000000e+00 : f32
    %27 = vector.broadcast %cst_12 : f32 to vector<16x128xf32>
    %28 = arith.maximumf %26, %27 : vector<16x128xf32>
    %29 = arith.truncf %28 : vector<16x128xf32> to vector<16x128xbf16>
    %c0_13 = arith.constant 0 : index
    %c0_14 = arith.constant 0 : index
    %30 = vector.load %arg7[%c0_13, %c0_14] : memref<128x1024xbf16, #tpu.memory_space<vmem>>, vector<128x256xbf16>
    %cst_15 = arith.constant dense<0.000000e+00> : vector<16x256xf32>
    %31 = tpu.matmul %29, %30, %cst_15 {dimension_numbers = #tpu.dot_dimension_numbers<[1], [0], [0], [1], [0, 0, 1, 1], [], []>} : vector<16x128xbf16>, vector<128x256xbf16>, vector<16x256xf32> -> vector<16x256xf32>
    %cst_16 = arith.constant dense<0xFF800000> : vector<256xf32>
    %32 = vector.multi_reduction <maximumf>, %31, %cst_16 [0] : vector<16x256xf32> to vector<256xf32>
    %33 = vector.shape_cast %32 : vector<256xf32> to vector<1x256xf32>
    %c0_17 = arith.constant 0 : index
    %c0_18 = arith.constant 0 : index
    %34 = vector.load %arg10[%c0_17, %c0_18] : memref<1x1024xf32, #tpu.memory_space<vmem>>, vector<1x256xf32>
    tpu.vector_store %arg10[%c0_17, %c0_18], %33 {strides = array<i32>} : memref<1x1024xf32, #tpu.memory_space<vmem>>, vector<1x256xf32>,
    %c0_19 = arith.constant 0 : index
    %c256 = arith.constant 256 : index
    %35 = vector.load %arg7[%c0_19, %c256] : memref<128x1024xbf16, #tpu.memory_space<vmem>>, vector<128x256xbf16>
    %cst_20 = arith.constant dense<0.000000e+00> : vector<16x256xf32>
    %36 = tpu.matmul %29, %35, %cst_20 {dimension_numbers = #tpu.dot_dimension_numbers<[1], [0], [0], [1], [0, 0, 1, 1], [], []>} : vector<16x128xbf16>, vector<128x256xbf16>, vector<16x256xf32> -> vector<16x256xf32>
    %cst_21 = arith.constant dense<0xFF800000> : vector<256xf32>
    %37 = vector.multi_reduction <maximumf>, %36, %cst_21 [0] : vector<16x256xf32> to vector<256xf32>
    %38 = vector.shape_cast %37 : vector<256xf32> to vector<1x256xf32>
    %c0_22 = arith.constant 0 : index
    %c256_23 = arith.constant 256 : index
    %39 = vector.load %arg10[%c0_22, %c256_23] : memref<1x1024xf32, #tpu.memory_space<vmem>>, vector<1x256xf32>
    tpu.vector_store %arg10[%c0_22, %c256_23], %38 {strides = array<i32>} : memref<1x1024xf32, #tpu.memory_space<vmem>>, vector<1x256xf32>,
    %c0_24 = arith.constant 0 : index
    %c512 = arith.constant 512 : index
    %40 = vector.load %arg7[%c0_24, %c512] : memref<128x1024xbf16, #tpu.memory_space<vmem>>, vector<128x256xbf16>
    %cst_25 = arith.constant dense<0.000000e+00> : vector<16x256xf32>
    %41 = tpu.matmul %29, %40, %cst_25 {dimension_numbers = #tpu.dot_dimension_numbers<[1], [0], [0], [1], [0, 0, 1, 1], [], []>} : vector<16x128xbf16>, vector<128x256xbf16>, vector<16x256xf32> -> vector<16x256xf32>
    %cst_26 = arith.constant dense<0xFF800000> : vector<256xf32>
    %42 = vector.multi_reduction <maximumf>, %41, %cst_26 [0] : vector<16x256xf32> to vector<256xf32>
    %43 = vector.shape_cast %42 : vector<256xf32> to vector<1x256xf32>
    %c0_27 = arith.constant 0 : index
    %c512_28 = arith.constant 512 : index
    %44 = vector.load %arg10[%c0_27, %c512_28] : memref<1x1024xf32, #tpu.memory_space<vmem>>, vector<1x256xf32>
    tpu.vector_store %arg10[%c0_27, %c512_28], %43 {strides = array<i32>} : memref<1x1024xf32, #tpu.memory_space<vmem>>, vector<1x256xf32>,
    %c0_29 = arith.constant 0 : index
    %c768 = arith.constant 768 : index
    %45 = vector.load %arg7[%c0_29, %c768] : memref<128x1024xbf16, #tpu.memory_space<vmem>>, vector<128x256xbf16>
    %cst_30 = arith.constant dense<0.000000e+00> : vector<16x256xf32>
    %46 = tpu.matmul %29, %45, %cst_30 {dimension_numbers = #tpu.dot_dimension_numbers<[1], [0], [0], [1], [0, 0, 1, 1], [], []>} : vector<16x128xbf16>, vector<128x256xbf16>, vector<16x256xf32> -> vector<16x256xf32>
    %cst_31 = arith.constant dense<0xFF800000> : vector<256xf32>
    %47 = vector.multi_reduction <maximumf>, %46, %cst_31 [0] : vector<16x256xf32> to vector<256xf32>
    %48 = vector.shape_cast %47 : vector<256xf32> to vector<1x256xf32>
    %c0_32 = arith.constant 0 : index
    %c768_33 = arith.constant 768 : index
    %49 = vector.load %arg10[%c0_32, %c768_33] : memref<1x1024xf32, #tpu.memory_space<vmem>>, vector<1x256xf32>
    tpu.vector_store %arg10[%c0_32, %c768_33], %48 {strides = array<i32>} : memref<1x1024xf32, #tpu.memory_space<vmem>>, vector<1x256xf32>,
    %c0_34 = arith.constant 0 : index
    %c0_35 = arith.constant 0 : index
    %50 = vector.load %arg10[%c0_34, %c0_35] : memref<1x1024xf32, #tpu.memory_space<vmem>>, vector<1x1024xf32>
    %c0_36 = arith.constant 0 : index
    %c0_37 = arith.constant 0 : index
    %51 = vector.load %arg8[%c0_36, %c0_37] : memref<1x1024xf32, #tpu.memory_space<vmem>>, vector<1x1024xf32>
    %52 = arith.addf %50, %51 : vector<1x1024xf32>
    %cst_38 = arith.constant 0.000000e+00 : f32
    %53 = vector.broadcast %cst_38 : f32 to vector<1x1024xf32>
    %54 = arith.maximumf %52, %53 : vector<1x1024xf32>
    %c0_i32 = arith.constant 0 : i32
    %55 = arith.cmpi eq, %arg1, %c0_i32 : i32
    %56 = arith.extui %55 : i1 to i32
    %c0_i32_39 = arith.constant 0 : i32
    %57 = arith.cmpi ne, %56, %c0_i32_39 : i32
    scf.if %57 {
      %c0_42 = arith.constant 0 : index
      %c0_43 = arith.constant 0 : index
      %c0_44 = arith.constant 0 : index
      %61 = vector.load %arg9[%c0_42, %c0_43, %c0_44] : memref<1x1x1024xf32, #tpu.memory_space<vmem>>, vector<1x1x1024xf32>
      %62 = vector.shape_cast %61 : vector<1x1x1024xf32> to vector<1x1024xf32>
      %63 = vector.shape_cast %54 : vector<1x1024xf32> to vector<1x1x1024xf32>
      tpu.vector_store %arg9[%c0_42, %c0_43, %c0_44], %63 {strides = array<i32>} : memref<1x1x1024xf32, #tpu.memory_space<vmem>>, vector<1x1x1024xf32>,
    } else {
    }
    %c0_i32_40 = arith.constant 0 : i32
    %58 = arith.cmpi sgt, %arg1, %c0_i32_40 : i32
    %59 = arith.extui %58 : i1 to i32
    %c0_i32_41 = arith.constant 0 : i32
    %60 = arith.cmpi ne, %59, %c0_i32_41 : i32
    scf.if %60 {
      %c0_42 = arith.constant 0 : index
      %c0_43 = arith.constant 0 : index
      %c0_44 = arith.constant 0 : index
      %61 = vector.load %arg9[%c0_42, %c0_43, %c0_44] : memref<1x1x1024xf32, #tpu.memory_space<vmem>>, vector<1x1x1024xf32>
      %62 = vector.shape_cast %61 : vector<1x1x1024xf32> to vector<1x1024xf32>
      %63 = arith.maximumf %62, %54 : vector<1x1024xf32>
      %c0_45 = arith.constant 0 : index
      %c0_46 = arith.constant 0 : index
      %c0_47 = arith.constant 0 : index
      %64 = vector.load %arg9[%c0_45, %c0_46, %c0_47] : memref<1x1x1024xf32, #tpu.memory_space<vmem>>, vector<1x1x1024xf32>
      %65 = vector.shape_cast %64 : vector<1x1x1024xf32> to vector<1x1024xf32>
      %66 = vector.shape_cast %63 : vector<1x1024xf32> to vector<1x1x1024xf32>
      tpu.vector_store %arg9[%c0_45, %c0_46, %c0_47], %66 {strides = array<i32>} : memref<1x1x1024xf32, #tpu.memory_space<vmem>>, vector<1x1x1024xf32>,
    } else {
    }
    return
  }
  func.func @transform_0(%arg0: i32, %arg1: i32) -> (i32, i32, i32) {
    %c0_i32 = arith.constant 0 : i32
    %c0_i32_0 = arith.constant 0 : i32
    return %arg0, %arg1, %c0_i32 : i32, i32, i32
  }
  func.func @transform_1(%arg0: i32, %arg1: i32) -> (i32, i32, i32) {
    %c0_i32 = arith.constant 0 : i32
    %c0_i32_0 = arith.constant 0 : i32
    %c0_i32_1 = arith.constant 0 : i32
    %c0_i32_2 = arith.constant 0 : i32
    return %c0_i32, %c0_i32_0, %c0_i32_1 : i32, i32, i32
  }
  func.func @transform_2(%arg0: i32, %arg1: i32) -> (i32, i32) {
    %c0_i32 = arith.constant 0 : i32
    %c0_i32_0 = arith.constant 0 : i32
    %c0_i32_1 = arith.constant 0 : i32
    return %c0_i32, %c0_i32_0 : i32, i32
  }
  func.func @transform_3(%arg0: i32, %arg1: i32) -> (i32, i32) {
    %c0_i32 = arith.constant 0 : i32
    %c0_i32_0 = arith.constant 0 : i32
    %c0_i32_1 = arith.constant 0 : i32
    return %c0_i32, %c0_i32_0 : i32, i32
  }
  func.func @transform_4(%arg0: i32, %arg1: i32) -> (i32, i32) {
    %c0_i32 = arith.constant 0 : i32
    %c0_i32_0 = arith.constant 0 : i32
    %c0_i32_1 = arith.constant 0 : i32
    return %c0_i32, %c0_i32_0 : i32, i32
  }
  func.func @transform_5(%arg0: i32, %arg1: i32) -> (i32, i32) {
    %c0_i32 = arith.constant 0 : i32
    %c0_i32_0 = arith.constant 0 : i32
    %c0_i32_1 = arith.constant 0 : i32
    return %c0_i32, %c0_i32_0 : i32, i32
  }
  func.func @transform_6(%arg0: i32, %arg1: i32) -> (i32, i32) {
    %c0_i32 = arith.constant 0 : i32
    %c0_i32_0 = arith.constant 0 : i32
    %c0_i32_1 = arith.constant 0 : i32
    return %c0_i32, %c0_i32_0 : i32, i32
  }
  func.func @transform_7(%arg0: i32, %arg1: i32) -> (i32, i32, i32) {
    %c0_i32 = arith.constant 0 : i32
    %c0_i32_0 = arith.constant 0 : i32
    %c0_i32_1 = arith.constant 0 : i32
    return %arg0, %c0_i32, %c0_i32_0 : i32, i32, i32
  }
}

</mosaic_0001>

<llo_original>
// kernel: tpu_custom_call.1
$region0: #{tpu_custom_call.1}
  #allocation0 [shape = 'u32[]', space=smem, size = 0x4, offset = 0x4, fixed_abs, tag = 'smem constant byte address 0x4 - core index']
  #allocation1 [shape = 'u32[72,128]{1,0:T(1,128)}', space=vmem, size = 0x9000, scoped, tag = 'internal scratch']
  #allocation2 [shape = 'f32[1,1024]{1,0:T(1,128)}', space=vmem, size = 0x1000, scoped, tag = 'scratch operand']
  %s0 = inlined_call_operand.vmem [shape: bf16[2,16,2], index: 0, kind: input, shape index: {}]
  %s1 = inlined_call_operand.vmem [shape: f32[1,2,64], index: 1, kind: input, shape index: {}]
  %s2 = inlined_call_operand.vmem [shape: f32[1,64], index: 2, kind: input, shape index: {}]
  %s3 = inlined_call_operand.hbm [shape: bf16[64,128], index: 3, kind: input, shape index: {}]
  %s4 = inlined_call_operand.vmem [shape: f32[1,128], index: 4, kind: input, shape index: {}]
  %s5 = inlined_call_operand.hbm [shape: bf16[128,1024], index: 5, kind: input, shape index: {}]
  %s6 = inlined_call_operand.vmem [shape: f32[1,1024], index: 6, kind: input, shape index: {}]
  %s7 = inlined_call_operand.hbm [shape: f32[2,1,1024], index: 7, kind: output, shape index: {}]
  %s8 = sld [smem:[#allocation0]]
  $region77: #{tpu_custom_call.1} parent=0
    _
  %s10 = ssub.s32 1, %s8
  %s11 = scalar_select 0, %s10, %s8
  $region1: #{tpu_custom_call.1} parent=0
    #allocation3 [shape = 'u8[16384]{0}', space=vmem, size = 0x4000, scoped, tag = 'input window, operand 3, single buffered']
    #allocation4 [shape = 's32[2]{0}', space=sflag, size = 0x8, scoped, tag = 'scoped memory for tpu_custom_call.1']
    #allocation5 [shape = 's32[2]{0}', space=sflag, size = 0x8, scoped, tag = 'scoped memory for tpu_custom_call.1']
    #allocation6 [shape = 'u8[262144]{0}', space=vmem, size = 0x40000, scoped, tag = 'input window, operand 5, single buffered']
    #allocation7 [shape = 's32[1]{0}', space=sflag, size = 0x4, scoped, tag = 'scoped memory for tpu_custom_call.1']
    #allocation8 [shape = 'u8[8192]{0}', space=vmem, size = 0x2000, scoped, tag = 'output window, operand 0']
    %12 = vsyncpa [#allocation4], 0
    %13 = vsyncpa [#allocation7], 0
    %14 = vsyncpa [#allocation5], 0
    %s15 = scalar_lea.sflag [#allocation5], 1
    %16 = vsyncpa %s15, 0
    loop: start=0, step=1, limit=4
    $region2: #{tpu_custom_call.1} parent=1 // loop_pre_header
      _
    $region3: #{tpu_custom_call.1} parent=1 // loop_header
      %s18 = sphi 0, %s22
      %p19 = scmp.ge.s32.totalorder %s18, 4
      %s25 = sphi 0, %s37
      %s26 = sphi 0, %s33
      %s27 = sphi 0, %s25
      %s28 = sphi 0, %s26
      %s29 = sphi 0, %s27
      %s30 = sphi 0, %s28
      %s42 = sphi 0, %s44
      %s45 = sphi 0, %s42
      %s46 = sphi 0, %s45
      %s62 = sphi 0, %s46
      %s66 = sphi 0, %s66
      %s68 = sphi 0, %s66
      %s69 = sphi 0, %s68
      %s83 = sphi 0, %s69
      %s87 = sphi 0, %s87
      %s89 = sphi 0, %s87
      %s90 = sphi 0, %s89
      %s104 = sphi 0, %s90
      %s108 = sphi 0, %s108
      %s110 = sphi 0, %s108
      %s111 = sphi 0, %s110
      %s125 = sphi 0, %s111
      %s129 = sphi 0, %s129
      %s131 = sphi 0, %s129
      %s132 = sphi 0, %s131
      %s146 = sphi 0, %s132
      %s150 = sphi 0, %s150
      %s152 = sphi 0, %s150
      %s153 = sphi 0, %s152
      %s167 = sphi 0, %s153
      %s171 = sphi 0, %s171
      %s173 = sphi 0, %s171
      %s174 = sphi 0, %s173
      %s188 = sphi 0, %s174
      %s194 = sphi 0, %s196
      %s197 = sphi 0, %s194
      %s198 = sphi 0, %s197
      %s214 = sphi 0, %s198
    $region4: #{tpu_custom_call.1} parent=1 // loop_header_branch
      %21 = sbr.rel (%p19) target = $region8
    $region5: #{tpu_custom_call.1} parent=1 // loop_body
      %s23 = ssub.s32 %s18, 1
      %s24 = ssub.s32 %s18, 2
      %s31 = sadd.s32 1, %s26
      %p32 = scmp.ge.s32.totalorder %s31, 1
      %s33 = scalar_select %p32, 0, %s31
      %s34 = sadd.s32 1, %s25
      %s35 = scalar_select %p32, %s34, %s25
      %p36 = scmp.ge.s32.totalorder %s35, 2
      %s37 = scalar_select %p36, 0, %s35
      %s38 = ssub.s32 %s25, %s37
      %s39 = ssub.s32 %s26, %s33
      %s40 = sor.u32 %s38, %s39
      %p41 = scmp.eq.s32.totalorder %s40, 0
      %s43 = sadd.s32 %s42, 1
      %s44 = scalar_select %p41, %s42, %s43
      %p47 = pneg %p41
      %p48 = scmp.eq.s32.totalorder %s18, 1
      %p49 = por %p47, %p48
      %p50 = scmp.ne.s32.totalorder %s42, %s45
      %p51 = scmp.eq.s32.totalorder %s18, 0
      %p52 = por %p50, %p51
      %p53 = scmp.ne.s32.totalorder %s42, %s45
      %p54 = scmp.eq.s32.totalorder %s23, 1
      %p55 = por %p53, %p54
      %p56 = scmp.ne.s32.totalorder %s45, %s46
      %p57 = scmp.eq.s32.totalorder %s23, 0
      %p58 = por %p56, %p57
      %p59 = scmp.ne.s32.totalorder %s45, %s46
      %p60 = scmp.eq.s32.totalorder %s24, 1
      %p61 = por %p59, %p60
      %p63 = scmp.ne.s32.totalorder %s46, %s62
      %p64 = scmp.eq.s32.totalorder %s24, 0
      %p65 = por %p63, %p64
      %s67 = sadd.s32 %s66, 1
      %p70 = scmp.eq.s32.totalorder %s18, 1
      %p71 = scmp.ne.s32.totalorder %s66, %s68
      %p72 = scmp.eq.s32.totalorder %s18, 0
      %p73 = por %p71, %p72
      %p74 = scmp.ne.s32.totalorder %s66, %s68
      %p75 = scmp.eq.s32.totalorder %s23, 1
      %p76 = por %p74, %p75
      %p77 = scmp.ne.s32.totalorder %s68, %s69
      %p78 = scmp.eq.s32.totalorder %s23, 0
      %p79 = por %p77, %p78
      %p80 = scmp.ne.s32.totalorder %s68, %s69
      %p81 = scmp.eq.s32.totalorder %s24, 1
      %p82 = por %p80, %p81
      %p84 = scmp.ne.s32.totalorder %s69, %s83
      %p85 = scmp.eq.s32.totalorder %s24, 0
      %p86 = por %p84, %p85
      %s88 = sadd.s32 %s87, 1
      %p91 = scmp.eq.s32.totalorder %s18, 1
      %p92 = scmp.ne.s32.totalorder %s87, %s89
      %p93 = scmp.eq.s32.totalorder %s18, 0
      %p94 = por %p92, %p93
      %p95 = scmp.ne.s32.totalorder %s87, %s89
      %p96 = scmp.eq.s32.totalorder %s23, 1
      %p97 = por %p95, %p96
      %p98 = scmp.ne.s32.totalorder %s89, %s90
      %p99 = scmp.eq.s32.totalorder %s23, 0
      %p100 = por %p98, %p99
      %p101 = scmp.ne.s32.totalorder %s89, %s90
      %p102 = scmp.eq.s32.totalorder %s24, 1
      %p103 = por %p101, %p102
      %p105 = scmp.ne.s32.totalorder %s90, %s104
      %p106 = scmp.eq.s32.totalorder %s24, 0
      %p107 = por %p105, %p106
      %s109 = sadd.s32 %s108, 1
      %p112 = scmp.eq.s32.totalorder %s18, 1
      %p113 = scmp.ne.s32.totalorder %s108, %s110
      %p114 = scmp.eq.s32.totalorder %s18, 0
      %p115 = por %p113, %p114
      %p116 = scmp.ne.s32.totalorder %s108, %s110
      %p117 = scmp.eq.s32.totalorder %s23, 1
      %p118 = por %p116, %p117
      %p119 = scmp.ne.s32.totalorder %s110, %s111
      %p120 = scmp.eq.s32.totalorder %s23, 0
      %p121 = por %p119, %p120
      %p122 = scmp.ne.s32.totalorder %s110, %s111
      %p123 = scmp.eq.s32.totalorder %s24, 1
      %p124 = por %p122, %p123
      %p126 = scmp.ne.s32.totalorder %s111, %s125
      %p127 = scmp.eq.s32.totalorder %s24, 0
      %p128 = por %p126, %p127
      %s130 = sadd.s32 %s129, 1
      %p133 = scmp.eq.s32.totalorder %s18, 1
      %p134 = scmp.ne.s32.totalorder %s129, %s131
      %p135 = scmp.eq.s32.totalorder %s18, 0
      %p136 = por %p134, %p135
      %p137 = scmp.ne.s32.totalorder %s129, %s131
      %p138 = scmp.eq.s32.totalorder %s23, 1
      %p139 = por %p137, %p138
      %p140 = scmp.ne.s32.totalorder %s131, %s132
      %p141 = scmp.eq.s32.totalorder %s23, 0
      %p142 = por %p140, %p141
      %p143 = scmp.ne.s32.totalorder %s131, %s132
      %p144 = scmp.eq.s32.totalorder %s24, 1
      %p145 = por %p143, %p144
      %p147 = scmp.ne.s32.totalorder %s132, %s146
      %p148 = scmp.eq.s32.totalorder %s24, 0
      %p149 = por %p147, %p148
      %s151 = sadd.s32 %s150, 1
      %p154 = scmp.eq.s32.totalorder %s18, 1
      %p155 = scmp.ne.s32.totalorder %s150, %s152
      %p156 = scmp.eq.s32.totalorder %s18, 0
      %p157 = por %p155, %p156
      %p158 = scmp.ne.s32.totalorder %s150, %s152
      %p159 = scmp.eq.s32.totalorder %s23, 1
      %p160 = por %p158, %p159
      %p161 = scmp.ne.s32.totalorder %s152, %s153
      %p162 = scmp.eq.s32.totalorder %s23, 0
      %p163 = por %p161, %p162
      %p164 = scmp.ne.s32.totalorder %s152, %s153
      %p165 = scmp.eq.s32.totalorder %s24, 1
      %p166 = por %p164, %p165
      %p168 = scmp.ne.s32.totalorder %s153, %s167
      %p169 = scmp.eq.s32.totalorder %s24, 0
      %p170 = por %p168, %p169
      %s172 = sadd.s32 %s171, 1
      %p175 = scmp.eq.s32.totalorder %s18, 1
      %p176 = scmp.ne.s32.totalorder %s171, %s173
      %p177 = scmp.eq.s32.totalorder %s18, 0
      %p178 = por %p176, %p177
      %p179 = scmp.ne.s32.totalorder %s171, %s173
      %p180 = scmp.eq.s32.totalorder %s23, 1
      %p181 = por %p179, %p180
      %p182 = scmp.ne.s32.totalorder %s173, %s174
      %p183 = scmp.eq.s32.totalorder %s23, 0
      %p184 = por %p182, %p183
      %p185 = scmp.ne.s32.totalorder %s173, %s174
      %p186 = scmp.eq.s32.totalorder %s24, 1
      %p187 = por %p185, %p186
      %p189 = scmp.ne.s32.totalorder %s174, %s188
      %p190 = scmp.eq.s32.totalorder %s24, 0
      %p191 = por %p189, %p190
      %s192 = ssub.s32 %s25, %s37
      %p193 = scmp.eq.s32.totalorder %s192, 0
      %s195 = sadd.s32 %s194, 1
      %s196 = scalar_select %p193, %s194, %s195
      %p199 = pneg %p193
      %p200 = scmp.eq.s32.totalorder %s18, 1
      %p201 = por %p199, %p200
      %p202 = scmp.ne.s32.totalorder %s194, %s197
      %p203 = scmp.eq.s32.totalorder %s18, 0
      %p204 = por %p202, %p203
      %p205 = scmp.ne.s32.totalorder %s194, %s197
      %p206 = scmp.eq.s32.totalorder %s23, 1
      %p207 = por %p205, %p206
      %p208 = scmp.ne.s32.totalorder %s197, %s198
      %p209 = scmp.eq.s32.totalorder %s23, 0
      %p210 = por %p208, %p209
      %p211 = scmp.ne.s32.totalorder %s197, %s198
      %p212 = scmp.eq.s32.totalorder %s24, 1
      %p213 = por %p211, %p212
      %p215 = scmp.ne.s32.totalorder %s198, %s214
      %p216 = scmp.eq.s32.totalorder %s24, 0
      %p217 = por %p215, %p216
      %p218 = scmp.le.s32.totalorder 1, %s18
      %p219 = scmp.lt.s32.totalorder %s18, 3
      %p220 = pnand %p218, %p219
      %p221 = pneg %p220
      // Predicated region
      $region9: #{tpu_custom_call.1} parent=5 // pred_check
        _
      $region10: #{tpu_custom_call.1} parent=5 // pred_check_branch
        %223 = sbr.rel (%p220) target = $region12
      $region11: #{tpu_custom_call.1} parent=5 // pred_region
        %s224 = ssub.s32 %s18, 1
        // Predicated region
        $region13: #{tpu_custom_call.1} parent=11 // pred_check
          %p225 = pneg %p79
        $region14: #{tpu_custom_call.1} parent=11 // pred_check_branch
          %227 = sbr.rel (%p225) target = $region16
        $region15: #{tpu_custom_call.1} parent=11 // pred_region
          _
        $region16: #{tpu_custom_call.1} parent=11 // pred_fallthru
          _
        // Predicated region
        $region17: #{tpu_custom_call.1} parent=11 // pred_check
          %p228 = pneg %p100
        $region18: #{tpu_custom_call.1} parent=11 // pred_check_branch
          %230 = sbr.rel (%p228) target = $region20
        $region19: #{tpu_custom_call.1} parent=11 // pred_region
          _
        $region20: #{tpu_custom_call.1} parent=11 // pred_fallthru
          _
        // Predicated region
        $region21: #{tpu_custom_call.1} parent=11 // pred_check
          %p231 = pneg %p121
        $region22: #{tpu_custom_call.1} parent=11 // pred_check_branch
          %233 = sbr.rel (%p231) target = $region24
        $region23: #{tpu_custom_call.1} parent=11 // pred_region
          %235 = vsyncadd [#allocation4], 0
          %s236 = sshll.u32 %s3, 4
          %s237 = int_to_ptr.hbm [resolvable:$true] %s236
          %s238 = sshll.u32 [#allocation3], 4
          %s239 = int_to_ptr.vmem [resolvable:$true] %s238
          %244 = dma.hbm_to_vmem [thread:$0]  %s237, 512, %s239, [#allocation4], 64, 64, 4
        $region24: #{tpu_custom_call.1} parent=11 // pred_fallthru
          _
        // Predicated region
        $region25: #{tpu_custom_call.1} parent=11 // pred_check
          %p245 = pneg %p142
        $region26: #{tpu_custom_call.1} parent=11 // pred_check_branch
          %247 = sbr.rel (%p245) target = $region28
        $region27: #{tpu_custom_call.1} parent=11 // pred_region
          _
        $region28: #{tpu_custom_call.1} parent=11 // pred_fallthru
          _
        // Predicated region
        $region29: #{tpu_custom_call.1} parent=11 // pred_check
          %p248 = pneg %p163
        $region30: #{tpu_custom_call.1} parent=11 // pred_check_branch
          %250 = sbr.rel (%p248) target = $region32
        $region31: #{tpu_custom_call.1} parent=11 // pred_region
          %252 = vsyncadd [#allocation7], 0
          %s253 = sshll.u32 %s5, 4
          %s254 = int_to_ptr.hbm [resolvable:$true] %s253
          %s255 = sshll.u32 [#allocation6], 4
          %s256 = int_to_ptr.vmem [resolvable:$true] %s255
          %261 = dma.hbm_to_vmem [thread:$0]  %s254, 8192, %s256, [#allocation7], 512, 512, 32
        $region32: #{tpu_custom_call.1} parent=11 // pred_fallthru
          _
        // Predicated region
        $region33: #{tpu_custom_call.1} parent=11 // pred_check
          %p262 = pneg %p184
        $region34: #{tpu_custom_call.1} parent=11 // pred_check_branch
          %264 = sbr.rel (%p262) target = $region36
        $region35: #{tpu_custom_call.1} parent=11 // pred_region
          _
        $region36: #{tpu_custom_call.1} parent=11 // pred_fallthru
          _
      $region12: #{tpu_custom_call.1} parent=5 // pred_fallthru
        _
      %p265 = scmp.lt.s32.totalorder %s18, 2
      // Predicated region
      $region37: #{tpu_custom_call.1} parent=5 // pred_check
        %p266 = pneg %p265
      $region38: #{tpu_custom_call.1} parent=5 // pred_check_branch
        %268 = sbr.rel (%p266) target = $region40
      $region39: #{tpu_custom_call.1} parent=5 // pred_region
        // Predicated region
        $region41: #{tpu_custom_call.1} parent=39 // pred_check
          %p269 = pneg %p52
        $region42: #{tpu_custom_call.1} parent=39 // pred_check_branch
          %271 = sbr.rel (%p269) target = $region44
        $region43: #{tpu_custom_call.1} parent=39 // pred_region
          %s272 = smul.u32 2, %s26
          %p273 = scmp.lt.s32.totalorder %s25, 1
          %s274 = scalar_select %p273, %s25, 1
          %p275 = scmp.lt.s32.totalorder %s272, 1
          %s276 = scalar_select %p275, %s272, 1
          %s277 = smul.addr %s274, 2
          %s278 = sadd.s32 %s276, %s277
          %s279 = smul.addr %s278, 4
          %s280 = scalar_lea.vmem %s0, %s279
          %s281 = smul.u32 2, %s26
        $region44: #{tpu_custom_call.1} parent=39 // pred_fallthru
          _
      $region40: #{tpu_custom_call.1} parent=5 // pred_fallthru
        _
      %p282 = scmp.le.s32.totalorder 1, %s18
      %p283 = scmp.lt.s32.totalorder %s18, 3
      %p284 = pnand %p282, %p283
      %p285 = pneg %p284
      // Predicated region
      $region45: #{tpu_custom_call.1} parent=5 // pred_check
        _
      $region46: #{tpu_custom_call.1} parent=5 // pred_check_branch
        %287 = sbr.rel (%p284) target = $region48
      $region47: #{tpu_custom_call.1} parent=5 // pred_region
        %s288 = ssub.s32 %s18, 1
        // Predicated region
        $region49: #{tpu_custom_call.1} parent=47 // pred_check
          %p289 = pneg %p121
        $region50: #{tpu_custom_call.1} parent=47 // pred_check_branch
          %291 = sbr.rel (%p289) target = $region52
        $region51: #{tpu_custom_call.1} parent=47 // pred_region
          %293 = dma.done [#allocation4], 512
        $region52: #{tpu_custom_call.1} parent=47 // pred_fallthru
          _
        // Predicated region
        $region53: #{tpu_custom_call.1} parent=47 // pred_check
          %p294 = pneg %p163
        $region54: #{tpu_custom_call.1} parent=47 // pred_check_branch
          %296 = sbr.rel (%p294) target = $region56
        $region55: #{tpu_custom_call.1} parent=47 // pred_region
          %298 = dma.done [#allocation7], 8192
        $region56: #{tpu_custom_call.1} parent=47 // pred_fallthru
          _
        %s299 = smul.u32 2, %s28
        %p300 = scmp.lt.s32.totalorder %s27, 1
        %s301 = scalar_select %p300, %s27, 1
        %p302 = scmp.lt.s32.totalorder %s299, 1
        %s303 = scalar_select %p302, %s299, 1
        %s304 = smul.addr %s301, 2
        %s305 = sadd.s32 %s303, %s304
        %s306 = smul.addr %s305, 4
        %s307 = scalar_lea.vmem %s0, %s306
        %p308 = pneg %p58
        %p309 = pneg %p55
        %p310 = pneg %p79
        %p311 = pneg %p76
        %p312 = pneg %p100
        %p313 = pneg %p97
        %p314 = pneg %p121
        %p315 = pneg %p118
        %p316 = pneg %p142
        %p317 = pneg %p139
        %p318 = pneg %p163
        %p319 = pneg %p160
        %p320 = pneg %p184
        %p321 = pneg %p181
        %p322 = pneg %p210
        %p323 = pneg %p207
        %s324 = sand.u32 %s197, 1
        %s325 = scalar_lea.sflag [#allocation5], %s324
        %s326 = sand.u32 %s197, 1
        %s327 = smul.addr %s326, 8
        %s328 = scalar_lea.vmem [#allocation8], %s327
        %s329 = smul.u32 2, %s28
        %p330 = scmp.lt.s32.totalorder %s27, 1
        %s331 = scalar_select %p330, %s27, 1
        %p332 = scmp.lt.s32.totalorder %s329, 1
        %s333 = scalar_select %p332, %s329, 1
        %s334 = smul.addr %s331, 2
        %s335 = sadd.s32 %s333, %s334
        %s336 = smul.addr %s335, 4
        %s337 = scalar_lea.vmem %s0, %s336
        %s338 = smul.u32 2, %s28
        %v340 = vld [vmem:[%s337] sm:$0xf]
        %v341 = vld [vmem:[%s337 + $0x4] sm:$0xf]
        %v342 = vunpack.c.l.bf16 %v340
        %v343 = vunpack.c.l.bf16 %v341
        %v344 = vld [vmem:[%s1] sm:$0x3]
        %346 = vset.pattern.permute.xlu0 0
        %347 = vperm.xlu0 %346, %v342
        %v348 = vpop.permute.xlu0 %347
        %351 = vset.pattern.permute.xlu0 0
        %352 = vperm.xlu0 %351, %v343
        %v353 = vpop.permute.xlu0 %352
        %v355 = vperm.slane %v344, 0
        %v356 = vmul.f32 %v348, %v355
        %v357 = vmul.f32 %v353, %v355
        %358 = vset.pattern.permute.xlu0 1
        %359 = vperm.xlu0 %358, %v342
        %v360 = vpop.permute.xlu0 %359
        %362 = vset.pattern.permute.xlu0 1
        %363 = vperm.xlu0 %362, %v343
        %v364 = vpop.permute.xlu0 %363
        %v366 = vperm.slane %v344, 1
        %v367 = vmul.f32 %v360, %v366
        %v368 = vmul.f32 %v364, %v366
        %v369 = vadd.f32 %v356, %v367
        %v370 = vadd.f32 %v357, %v368
        %v371 = vld [vmem:[%s2] sm:$0x1]
        %v373 = vperm.slane %v371, 0
        %v375 = vadd.f32 %v369, %v373
        %v376 = vadd.f32 %v370, %v373
        %v377 = vmax.f32 %v375, 0.0
        %v378 = vmax.f32 %v376, 0.0
        %v379 = vpack.c.bf16 %v378, %v377
        %v380 = vld [vmem:[#allocation3] sm:$0xf]
        %v381 = vld [vmem:[#allocation3 + $0x4] sm:$0xf]
        %v382 = vld [vmem:[#allocation3 + $0x8] sm:$0xf]
        %v383 = vld [vmem:[#allocation3 + $0xc] sm:$0xf]
        %v384 = vld [vmem:[#allocation3 + $0x10] sm:$0xf]
        %v385 = vld [vmem:[#allocation3 + $0x14] sm:$0xf]
        %v386 = vld [vmem:[#allocation3 + $0x18] sm:$0xf]
        %v387 = vld [vmem:[#allocation3 + $0x1c] sm:$0xf]
        %v388 = vld [vmem:[%s4] sm:$0x1]
        %v390 = vperm.slane %v388, 0
        %v400 = vunpack.c.l.b16 %v380
        %v401 = vunpack.c.l.b16 %v381
        %v402 = vunpack.c.l.b16 %v382
        %v403 = vunpack.c.l.b16 %v383
        %v404 = vunpack.c.l.b16 %v384
        %v405 = vunpack.c.l.b16 %v385
        %v406 = vunpack.c.l.b16 %v386
        %v407 = vunpack.c.l.b16 %v387
        %v408 = vpack.c.b16 %v401, %v400
        %v409 = vpack.c.b16 %v403, %v402
        %v410 = vpack.c.b16 %v405, %v404
        %v411 = vpack.c.b16 %v407, %v406
        %vm416 = vcmask 523264
        %v418 = vsel %vm416, %v379, 0
        %420 = vmatpush.bf16.msra.mxu0 0
        %421 = vmatpush.bf16.msra.mxu0 0
        %422 = vmatpush.bf16.msra.mxu0 0
        %423 = vmatpush.bf16.msra.mxu0 0
        %424 = vmatpush.bf16.msra.mxu0 %v411
        %425 = vmatpush.bf16.msra.mxu0 %v410
        %426 = vmatpush.bf16.msra.mxu0 %v409
        %427 = vmatpush.bf16.msra.mxu0 %v408
        %428 = vmatmul.bf16.gmra.mxu0 %v418
        %v429 = vpop.f32.mrf.mxu0
        %v430 = vadd.f32 %v390, %v429
        %v431 = vpop.f32.mrf.mxu0
        %v432 = vadd.f32 %v390, %v431
        %433 = vdwg.mxu0
        %v434 = vmax.f32 %v430, 0.0
        %v435 = vmax.f32 %v432, 0.0
        %v436 = vpack.c.bf16 %v435, %v434
        %v437 = vld [vmem:[#allocation6] sm:$0xff]
        %v438 = vld [vmem:[#allocation6 + $0x20] sm:$0xff]
        %v439 = vld [vmem:[#allocation6 + $0x40] sm:$0xff]
        %v440 = vld [vmem:[#allocation6 + $0x60] sm:$0xff]
        %v441 = vld [vmem:[#allocation6 + $0x80] sm:$0xff]
        %v442 = vld [vmem:[#allocation6 + $0xa0] sm:$0xff]
        %v443 = vld [vmem:[#allocation6 + $0xc0] sm:$0xff]
        %v444 = vld [vmem:[#allocation6 + $0xe0] sm:$0xff]
        %v445 = vld [vmem:[#allocation6 + $0x100] sm:$0xff]
        %v446 = vld [vmem:[#allocation6 + $0x120] sm:$0xff]
        %v447 = vld [vmem:[#allocation6 + $0x140] sm:$0xff]
        %v448 = vld [vmem:[#allocation6 + $0x160] sm:$0xff]
        %v449 = vld [vmem:[#allocation6 + $0x180] sm:$0xff]
        %v450 = vld [vmem:[#allocation6 + $0x1a0] sm:$0xff]
        %v451 = vld [vmem:[#allocation6 + $0x1c0] sm:$0xff]
        %v452 = vld [vmem:[#allocation6 + $0x1e0] sm:$0xff]
        %v469 = vunpack.c.l.b16 %v437
        %v470 = vunpack.c.h.b16 %v437
        %v471 = vunpack.c.l.b16 %v438
        %v472 = vunpack.c.h.b16 %v438
        %v473 = vunpack.c.l.b16 %v439
        %v474 = vunpack.c.h.b16 %v439
        %v475 = vunpack.c.l.b16 %v440
        %v476 = vunpack.c.h.b16 %v440
        %v477 = vunpack.c.l.b16 %v441
        %v478 = vunpack.c.h.b16 %v441
        %v479 = vunpack.c.l.b16 %v442
        %v480 = vunpack.c.h.b16 %v442
        %v481 = vunpack.c.l.b16 %v443
        %v482 = vunpack.c.h.b16 %v443
        %v483 = vunpack.c.l.b16 %v444
        %v484 = vunpack.c.h.b16 %v444
        %v485 = vunpack.c.l.b16 %v445
        %v486 = vunpack.c.h.b16 %v445
        %v487 = vunpack.c.l.b16 %v446
        %v488 = vunpack.c.h.b16 %v446
        %v489 = vunpack.c.l.b16 %v447
        %v490 = vunpack.c.h.b16 %v447
        %v491 = vunpack.c.l.b16 %v448
        %v492 = vunpack.c.h.b16 %v448
        %v493 = vunpack.c.l.b16 %v449
        %v494 = vunpack.c.h.b16 %v449
        %v495 = vunpack.c.l.b16 %v450
        %v496 = vunpack.c.h.b16 %v450
        %v497 = vunpack.c.l.b16 %v451
        %v498 = vunpack.c.h.b16 %v451
        %v499 = vunpack.c.l.b16 %v452
        %v500 = vunpack.c.h.b16 %v452
        %v501 = vpack.c.b16 %v471, %v469
        %v502 = vpack.c.b16 %v472, %v470
        %v503 = vpack.c.b16 %v475, %v473
        %v504 = vpack.c.b16 %v476, %v474
        %v505 = vpack.c.b16 %v479, %v477
        %v506 = vpack.c.b16 %v480, %v478
        %v507 = vpack.c.b16 %v483, %v481
        %v508 = vpack.c.b16 %v484, %v482
        %v509 = vpack.c.b16 %v487, %v485
        %v510 = vpack.c.b16 %v488, %v486
        %v511 = vpack.c.b16 %v491, %v489
        %v512 = vpack.c.b16 %v492, %v490
        %v513 = vpack.c.b16 %v495, %v493
        %v514 = vpack.c.b16 %v496, %v494
        %v515 = vpack.c.b16 %v499, %v497
        %v516 = vpack.c.b16 %v500, %v498
        %533 = vmatpush.bf16.msra.mxu0 %v515
        %534 = vmatpush.bf16.msra.mxu0 %v513
        %535 = vmatpush.bf16.msra.mxu0 %v511
        %536 = vmatpush.bf16.msra.mxu0 %v509
        %537 = vmatpush.bf16.msra.mxu0 %v507
        %538 = vmatpush.bf16.msra.mxu0 %v505
        %539 = vmatpush.bf16.msra.mxu0 %v503
        %540 = vmatpush.bf16.msra.mxu0 %v501
        %541 = vmatmul.bf16.gmra.mxu0 %v436
        %v542 = vpop.f32.mrf.mxu0
        %v543 = vadd.f32 0.0, %v542
        %v544 = vpop.f32.mrf.mxu0
        %v545 = vadd.f32 0.0, %v544
        %546 = vdwg.mxu0
        %547 = vmatpush.bf16.msra.mxu0 %v516
        %548 = vmatpush.bf16.msra.mxu0 %v514
        %549 = vmatpush.bf16.msra.mxu0 %v512
        %550 = vmatpush.bf16.msra.mxu0 %v510
        %551 = vmatpush.bf16.msra.mxu0 %v508
        %552 = vmatpush.bf16.msra.mxu0 %v506
        %553 = vmatpush.bf16.msra.mxu0 %v504
        %554 = vmatpush.bf16.msra.mxu0 %v502
        %555 = vmatmul.bf16.gmra.mxu0 %v436
        %v556 = vpop.f32.mrf.mxu0
        %v557 = vadd.f32 0.0, %v556
        %v558 = vpop.f32.mrf.mxu0
        %v559 = vadd.f32 0.0, %v558
        %560 = vdwg.mxu0
        %v561 = vmax.f32 %v543, %v545
        %v562 = vrot.slane %v561, 4
        %v563 = vmax.f32 %v561, %v562
        %v564 = vrot.slane %v563, 2
        %v565 = vmax.f32 %v563, %v564
        %v566 = vrot.slane %v565, 1
        %v567 = vmax.f32 %v565, %v566
        %v568 = vmax.f32 %v557, %v559
        %v569 = vrot.slane %v568, 4
        %v570 = vmax.f32 %v568, %v569
        %v571 = vrot.slane %v570, 2
        %v572 = vmax.f32 %v570, %v571
        %v573 = vrot.slane %v572, 1
        %v574 = vmax.f32 %v572, %v573
        %v577 = vrot.slane %v574, 7
        %vm578 = vcmask 1040384
        %v579 = vsel %vm578, %v567, %v577
        %v581 = vlaneseq
        %vm582 = vcmp.ge.s32.totalorder %v581, 0
        %vm583 = vcmp.lt.s32.totalorder %v581, 256
        %vm584 = vmand %vm582, %vm583
        %585 = vst.msk [vmem:[#allocation2] sm:$0x3] %vm584, %v579
        %v586 = vld [vmem:[#allocation6 + $0x8] sm:$0xff]
        %v587 = vld [vmem:[#allocation6 + $0x28] sm:$0xff]
        %v588 = vld [vmem:[#allocation6 + $0x48] sm:$0xff]
        %v589 = vld [vmem:[#allocation6 + $0x68] sm:$0xff]
        %v590 = vld [vmem:[#allocation6 + $0x88] sm:$0xff]
        %v591 = vld [vmem:[#allocation6 + $0xa8] sm:$0xff]
        %v592 = vld [vmem:[#allocation6 + $0xc8] sm:$0xff]
        %v593 = vld [vmem:[#allocation6 + $0xe8] sm:$0xff]
        %v594 = vld [vmem:[#allocation6 + $0x108] sm:$0xff]
        %v595 = vld [vmem:[#allocation6 + $0x128] sm:$0xff]
        %v596 = vld [vmem:[#allocation6 + $0x148] sm:$0xff]
        %v597 = vld [vmem:[#allocation6 + $0x168] sm:$0xff]
        %v598 = vld [vmem:[#allocation6 + $0x188] sm:$0xff]
        %v599 = vld [vmem:[#allocation6 + $0x1a8] sm:$0xff]
        %v600 = vld [vmem:[#allocation6 + $0x1c8] sm:$0xff]
        %v601 = vld [vmem:[#allocation6 + $0x1e8] sm:$0xff]
        %v618 = vunpack.c.l.b16 %v586
        %v619 = vunpack.c.h.b16 %v586
        %v620 = vunpack.c.l.b16 %v587
        %v621 = vunpack.c.h.b16 %v587
        %v622 = vunpack.c.l.b16 %v588
        %v623 = vunpack.c.h.b16 %v588
        %v624 = vunpack.c.l.b16 %v589
        %v625 = vunpack.c.h.b16 %v589
        %v626 = vunpack.c.l.b16 %v590
        %v627 = vunpack.c.h.b16 %v590
        %v628 = vunpack.c.l.b16 %v591
        %v629 = vunpack.c.h.b16 %v591
        %v630 = vunpack.c.l.b16 %v592
        %v631 = vunpack.c.h.b16 %v592
        %v632 = vunpack.c.l.b16 %v593
        %v633 = vunpack.c.h.b16 %v593
        %v634 = vunpack.c.l.b16 %v594
        %v635 = vunpack.c.h.b16 %v594
        %v636 = vunpack.c.l.b16 %v595
        %v637 = vunpack.c.h.b16 %v595
        %v638 = vunpack.c.l.b16 %v596
        %v639 = vunpack.c.h.b16 %v596
        %v640 = vunpack.c.l.b16 %v597
        %v641 = vunpack.c.h.b16 %v597
        %v642 = vunpack.c.l.b16 %v598
        %v643 = vunpack.c.h.b16 %v598
        %v644 = vunpack.c.l.b16 %v599
        %v645 = vunpack.c.h.b16 %v599
        %v646 = vunpack.c.l.b16 %v600
        %v647 = vunpack.c.h.b16 %v600
        %v648 = vunpack.c.l.b16 %v601
        %v649 = vunpack.c.h.b16 %v601
        %v650 = vpack.c.b16 %v620, %v618
        %v651 = vpack.c.b16 %v621, %v619
        %v652 = vpack.c.b16 %v624, %v622
        %v653 = vpack.c.b16 %v625, %v623
        %v654 = vpack.c.b16 %v628, %v626
        %v655 = vpack.c.b16 %v629, %v627
        %v656 = vpack.c.b16 %v632, %v630
        %v657 = vpack.c.b16 %v633, %v631
        %v658 = vpack.c.b16 %v636, %v634
        %v659 = vpack.c.b16 %v637, %v635
        %v660 = vpack.c.b16 %v640, %v638
        %v661 = vpack.c.b16 %v641, %v639
        %v662 = vpack.c.b16 %v644, %v642
        %v663 = vpack.c.b16 %v645, %v643
        %v664 = vpack.c.b16 %v648, %v646
        %v665 = vpack.c.b16 %v649, %v647
        %682 = vmatpush.bf16.msra.mxu0 %v664
        %683 = vmatpush.bf16.msra.mxu0 %v662
        %684 = vmatpush.bf16.msra.mxu0 %v660
        %685 = vmatpush.bf16.msra.mxu0 %v658
        %686 = vmatpush.bf16.msra.mxu0 %v656
        %687 = vmatpush.bf16.msra.mxu0 %v654
        %688 = vmatpush.bf16.msra.mxu0 %v652
        %689 = vmatpush.bf16.msra.mxu0 %v650
        %690 = vmatmul.bf16.gmra.mxu0 %v436
        %v691 = vpop.f32.mrf.mxu0
        %v692 = vadd.f32 0.0, %v691
        %v693 = vpop.f32.mrf.mxu0
        %v694 = vadd.f32 0.0, %v693
        %695 = vdwg.mxu0
        %696 = vmatpush.bf16.msra.mxu0 %v665
        %697 = vmatpush.bf16.msra.mxu0 %v663
        %698 = vmatpush.bf16.msra.mxu0 %v661
        %699 = vmatpush.bf16.msra.mxu0 %v659
        %700 = vmatpush.bf16.msra.mxu0 %v657
        %701 = vmatpush.bf16.msra.mxu0 %v655
        %702 = vmatpush.bf16.msra.mxu0 %v653
        %703 = vmatpush.bf16.msra.mxu0 %v651
        %704 = vmatmul.bf16.gmra.mxu0 %v436
        %v705 = vpop.f32.mrf.mxu0
        %v706 = vadd.f32 0.0, %v705
        %v707 = vpop.f32.mrf.mxu0
        %v708 = vadd.f32 0.0, %v707
        %709 = vdwg.mxu0
        %v710 = vmax.f32 %v692, %v694
        %v711 = vrot.slane %v710, 4
        %v712 = vmax.f32 %v710, %v711
        %v713 = vrot.slane %v712, 2
        %v714 = vmax.f32 %v712, %v713
        %v715 = vrot.slane %v714, 1
        %v716 = vmax.f32 %v714, %v715
        %v717 = vmax.f32 %v706, %v708
        %v718 = vrot.slane %v717, 4
        %v719 = vmax.f32 %v717, %v718
        %v720 = vrot.slane %v719, 2
        %v721 = vmax.f32 %v719, %v720
        %v722 = vrot.slane %v721, 1
        %v723 = vmax.f32 %v721, %v722
        %v726 = vrot.slane %v723, 7
        %v727 = vsel %vm578, %v716, %v726
        %729 = vst.msk [vmem:[#allocation2 + $0x2] sm:$0x3] %vm584, %v727
        %v730 = vld [vmem:[#allocation6 + $0x10] sm:$0xff]
        %v731 = vld [vmem:[#allocation6 + $0x30] sm:$0xff]
        %v732 = vld [vmem:[#allocation6 + $0x50] sm:$0xff]
        %v733 = vld [vmem:[#allocation6 + $0x70] sm:$0xff]
        %v734 = vld [vmem:[#allocation6 + $0x90] sm:$0xff]
        %v735 = vld [vmem:[#allocation6 + $0xb0] sm:$0xff]
        %v736 = vld [vmem:[#allocation6 + $0xd0] sm:$0xff]
        %v737 = vld [vmem:[#allocation6 + $0xf0] sm:$0xff]
        %v738 = vld [vmem:[#allocation6 + $0x110] sm:$0xff]
        %v739 = vld [vmem:[#allocation6 + $0x130] sm:$0xff]
        %v740 = vld [vmem:[#allocation6 + $0x150] sm:$0xff]
        %v741 = vld [vmem:[#allocation6 + $0x170] sm:$0xff]
        %v742 = vld [vmem:[#allocation6 + $0x190] sm:$0xff]
        %v743 = vld [vmem:[#allocation6 + $0x1b0] sm:$0xff]
        %v744 = vld [vmem:[#allocation6 + $0x1d0] sm:$0xff]
        %v745 = vld [vmem:[#allocation6 + $0x1f0] sm:$0xff]
        %v762 = vunpack.c.l.b16 %v730
        %v763 = vunpack.c.h.b16 %v730
        %v764 = vunpack.c.l.b16 %v731
        %v765 = vunpack.c.h.b16 %v731
        %v766 = vunpack.c.l.b16 %v732
        %v767 = vunpack.c.h.b16 %v732
        %v768 = vunpack.c.l.b16 %v733
        %v769 = vunpack.c.h.b16 %v733
        %v770 = vunpack.c.l.b16 %v734
        %v771 = vunpack.c.h.b16 %v734
        %v772 = vunpack.c.l.b16 %v735
        %v773 = vunpack.c.h.b16 %v735
        %v774 = vunpack.c.l.b16 %v736
        %v775 = vunpack.c.h.b16 %v736
        %v776 = vunpack.c.l.b16 %v737
        %v777 = vunpack.c.h.b16 %v737
        %v778 = vunpack.c.l.b16 %v738
        %v779 = vunpack.c.h.b16 %v738
        %v780 = vunpack.c.l.b16 %v739
        %v781 = vunpack.c.h.b16 %v739
        %v782 = vunpack.c.l.b16 %v740
        %v783 = vunpack.c.h.b16 %v740
        %v784 = vunpack.c.l.b16 %v741
        %v785 = vunpack.c.h.b16 %v741
        %v786 = vunpack.c.l.b16 %v742
        %v787 = vunpack.c.h.b16 %v742
        %v788 = vunpack.c.l.b16 %v743
        %v789 = vunpack.c.h.b16 %v743
        %v790 = vunpack.c.l.b16 %v744
        %v791 = vunpack.c.h.b16 %v744
        %v792 = vunpack.c.l.b16 %v745
        %v793 = vunpack.c.h.b16 %v745
        %v794 = vpack.c.b16 %v764, %v762
        %v795 = vpack.c.b16 %v765, %v763
        %v796 = vpack.c.b16 %v768, %v766
        %v797 = vpack.c.b16 %v769, %v767
        %v798 = vpack.c.b16 %v772, %v770
        %v799 = vpack.c.b16 %v773, %v771
        %v800 = vpack.c.b16 %v776, %v774
        %v801 = vpack.c.b16 %v777, %v775
        %v802 = vpack.c.b16 %v780, %v778
        %v803 = vpack.c.b16 %v781, %v779
        %v804 = vpack.c.b16 %v784, %v782
        %v805 = vpack.c.b16 %v785, %v783
        %v806 = vpack.c.b16 %v788, %v786
        %v807 = vpack.c.b16 %v789, %v787
        %v808 = vpack.c.b16 %v792, %v790
        %v809 = vpack.c.b16 %v793, %v791
        %826 = vmatpush.bf16.msra.mxu0 %v808
        %827 = vmatpush.bf16.msra.mxu0 %v806
        %828 = vmatpush.bf16.msra.mxu0 %v804
        %829 = vmatpush.bf16.msra.mxu0 %v802
        %830 = vmatpush.bf16.msra.mxu0 %v800
        %831 = vmatpush.bf16.msra.mxu0 %v798
        %832 = vmatpush.bf16.msra.mxu0 %v796
        %833 = vmatpush.bf16.msra.mxu0 %v794
        %834 = vmatmul.bf16.gmra.mxu0 %v436
        %v835 = vpop.f32.mrf.mxu0
        %v836 = vadd.f32 0.0, %v835
        %v837 = vpop.f32.mrf.mxu0
        %v838 = vadd.f32 0.0, %v837
        %839 = vdwg.mxu0
        %840 = vmatpush.bf16.msra.mxu0 %v809
        %841 = vmatpush.bf16.msra.mxu0 %v807
        %842 = vmatpush.bf16.msra.mxu0 %v805
        %843 = vmatpush.bf16.msra.mxu0 %v803
        %844 = vmatpush.bf16.msra.mxu0 %v801
        %845 = vmatpush.bf16.msra.mxu0 %v799
        %846 = vmatpush.bf16.msra.mxu0 %v797
        %847 = vmatpush.bf16.msra.mxu0 %v795
        %848 = vmatmul.bf16.gmra.mxu0 %v436
        %v849 = vpop.f32.mrf.mxu0
        %v850 = vadd.f32 0.0, %v849
        %v851 = vpop.f32.mrf.mxu0
        %v852 = vadd.f32 0.0, %v851
        %853 = vdwg.mxu0
        %v854 = vmax.f32 %v836, %v838
        %v855 = vrot.slane %v854, 4
        %v856 = vmax.f32 %v854, %v855
        %v857 = vrot.slane %v856, 2
        %v858 = vmax.f32 %v856, %v857
        %v859 = vrot.slane %v858, 1
        %v860 = vmax.f32 %v858, %v859
        %v861 = vmax.f32 %v850, %v852
        %v862 = vrot.slane %v861, 4
        %v863 = vmax.f32 %v861, %v862
        %v864 = vrot.slane %v863, 2
        %v865 = vmax.f32 %v863, %v864
        %v866 = vrot.slane %v865, 1
        %v867 = vmax.f32 %v865, %v866
        %v870 = vrot.slane %v867, 7
        %v871 = vsel %vm578, %v860, %v870
        %873 = vst.msk [vmem:[#allocation2 + $0x4] sm:$0x3] %vm584, %v871
        %v874 = vld [vmem:[#allocation6 + $0x18] sm:$0xff]
        %v875 = vld [vmem:[#allocation6 + $0x38] sm:$0xff]
        %v876 = vld [vmem:[#allocation6 + $0x58] sm:$0xff]
        %v877 = vld [vmem:[#allocation6 + $0x78] sm:$0xff]
        %v878 = vld [vmem:[#allocation6 + $0x98] sm:$0xff]
        %v879 = vld [vmem:[#allocation6 + $0xb8] sm:$0xff]
        %v880 = vld [vmem:[#allocation6 + $0xd8] sm:$0xff]
        %v881 = vld [vmem:[#allocation6 + $0xf8] sm:$0xff]
        %v882 = vld [vmem:[#allocation6 + $0x118] sm:$0xff]
        %v883 = vld [vmem:[#allocation6 + $0x138] sm:$0xff]
        %v884 = vld [vmem:[#allocation6 + $0x158] sm:$0xff]
        %v885 = vld [vmem:[#allocation6 + $0x178] sm:$0xff]
        %v886 = vld [vmem:[#allocation6 + $0x198] sm:$0xff]
        %v887 = vld [vmem:[#allocation6 + $0x1b8] sm:$0xff]
        %v888 = vld [vmem:[#allocation6 + $0x1d8] sm:$0xff]
        %v889 = vld [vmem:[#allocation6 + $0x1f8] sm:$0xff]
        %v906 = vunpack.c.l.b16 %v874
        %v907 = vunpack.c.h.b16 %v874
        %v908 = vunpack.c.l.b16 %v875
        %v909 = vunpack.c.h.b16 %v875
        %v910 = vunpack.c.l.b16 %v876
        %v911 = vunpack.c.h.b16 %v876
        %v912 = vunpack.c.l.b16 %v877
        %v913 = vunpack.c.h.b16 %v877
        %v914 = vunpack.c.l.b16 %v878
        %v915 = vunpack.c.h.b16 %v878
        %v916 = vunpack.c.l.b16 %v879
        %v917 = vunpack.c.h.b16 %v879
        %v918 = vunpack.c.l.b16 %v880
        %v919 = vunpack.c.h.b16 %v880
        %v920 = vunpack.c.l.b16 %v881
        %v921 = vunpack.c.h.b16 %v881
        %v922 = vunpack.c.l.b16 %v882
        %v923 = vunpack.c.h.b16 %v882
        %v924 = vunpack.c.l.b16 %v883
        %v925 = vunpack.c.h.b16 %v883
        %v926 = vunpack.c.l.b16 %v884
        %v927 = vunpack.c.h.b16 %v884
        %v928 = vunpack.c.l.b16 %v885
        %v929 = vunpack.c.h.b16 %v885
        %v930 = vunpack.c.l.b16 %v886
        %v931 = vunpack.c.h.b16 %v886
        %v932 = vunpack.c.l.b16 %v887
        %v933 = vunpack.c.h.b16 %v887
        %v934 = vunpack.c.l.b16 %v888
        %v935 = vunpack.c.h.b16 %v888
        %v936 = vunpack.c.l.b16 %v889
        %v937 = vunpack.c.h.b16 %v889
        %v938 = vpack.c.b16 %v908, %v906
        %v939 = vpack.c.b16 %v909, %v907
        %v940 = vpack.c.b16 %v912, %v910
        %v941 = vpack.c.b16 %v913, %v911
        %v942 = vpack.c.b16 %v916, %v914
        %v943 = vpack.c.b16 %v917, %v915
        %v944 = vpack.c.b16 %v920, %v918
        %v945 = vpack.c.b16 %v921, %v919
        %v946 = vpack.c.b16 %v924, %v922
        %v947 = vpack.c.b16 %v925, %v923
        %v948 = vpack.c.b16 %v928, %v926
        %v949 = vpack.c.b16 %v929, %v927
        %v950 = vpack.c.b16 %v932, %v930
        %v951 = vpack.c.b16 %v933, %v931
        %v952 = vpack.c.b16 %v936, %v934
        %v953 = vpack.c.b16 %v937, %v935
        %970 = vmatpush.bf16.msra.mxu0 %v952
        %971 = vmatpush.bf16.msra.mxu0 %v950
        %972 = vmatpush.bf16.msra.mxu0 %v948
        %973 = vmatpush.bf16.msra.mxu0 %v946
        %974 = vmatpush.bf16.msra.mxu0 %v944
        %975 = vmatpush.bf16.msra.mxu0 %v942
        %976 = vmatpush.bf16.msra.mxu0 %v940
        %977 = vmatpush.bf16.msra.mxu0 %v938
        %978 = vmatmul.bf16.gmra.mxu0 %v436
        %v979 = vpop.f32.mrf.mxu0
        %v980 = vadd.f32 0.0, %v979
        %v981 = vpop.f32.mrf.mxu0
        %v982 = vadd.f32 0.0, %v981
        %983 = vdwg.mxu0
        %984 = vmatpush.bf16.msra.mxu0 %v953
        %985 = vmatpush.bf16.msra.mxu0 %v951
        %986 = vmatpush.bf16.msra.mxu0 %v949
        %987 = vmatpush.bf16.msra.mxu0 %v947
        %988 = vmatpush.bf16.msra.mxu0 %v945
        %989 = vmatpush.bf16.msra.mxu0 %v943
        %990 = vmatpush.bf16.msra.mxu0 %v941
        %991 = vmatpush.bf16.msra.mxu0 %v939
        %992 = vmatmul.bf16.gmra.mxu0 %v436
        %v993 = vpop.f32.mrf.mxu0
        %v994 = vadd.f32 0.0, %v993
        %v995 = vpop.f32.mrf.mxu0
        %v996 = vadd.f32 0.0, %v995
        %997 = vdwg.mxu0
        %v998 = vmax.f32 %v980, %v982
        %v999 = vrot.slane %v998, 4
        %v1000 = vmax.f32 %v998, %v999
        %v1001 = vrot.slane %v1000, 2
        %v1002 = vmax.f32 %v1000, %v1001
        %v1003 = vrot.slane %v1002, 1
        %v1004 = vmax.f32 %v1002, %v1003
        %v1005 = vmax.f32 %v994, %v996
        %v1006 = vrot.slane %v1005, 4
        %v1007 = vmax.f32 %v1005, %v1006
        %v1008 = vrot.slane %v1007, 2
        %v1009 = vmax.f32 %v1007, %v1008
        %v1010 = vrot.slane %v1009, 1
        %v1011 = vmax.f32 %v1009, %v1010
        %v1014 = vrot.slane %v1011, 7
        %v1015 = vsel %vm578, %v1004, %v1014
        %1017 = vst.msk [vmem:[#allocation2 + $0x6] sm:$0x3] %vm584, %v1015
        %v1018 = vld [vmem:[#allocation2] sm:$0xff]
        %v1019 = vld [vmem:[%s6] sm:$0xff]
        %v1020 = vadd.f32 %v1018, %v1019
        %v1021 = vmax.f32 %v1020, 0.0
        %p1022 = scmp.eq.s32.totalorder %s28, 0
        // Predicated region
        $region57: #{tpu_custom_call.1} parent=47 // pred_check
          %p1023 = pneg %p1022
        $region58: #{tpu_custom_call.1} parent=47 // pred_check_branch
          %1025 = sbr.rel (%p1023) target = $region60
        $region59: #{tpu_custom_call.1} parent=47 // pred_region
          %1026 = vst [vmem:[%s328] sm:$0xff] %v1021
        $region60: #{tpu_custom_call.1} parent=47 // pred_fallthru
          _
        %p1027 = scmp.gt.s32.totalorder %s28, 0
        // Predicated region
        $region61: #{tpu_custom_call.1} parent=47 // pred_check
          %p1028 = pneg %p1027
        $region62: #{tpu_custom_call.1} parent=47 // pred_check_branch
          %1030 = sbr.rel (%p1028) target = $region64
        $region63: #{tpu_custom_call.1} parent=47 // pred_region
          %v1031 = vld [vmem:[%s328] sm:$0xff]
          %v1032 = vmax.f32 %v1031, %v1021
          %1033 = vst [vmem:[%s328] sm:$0xff] %v1032
        $region64: #{tpu_custom_call.1} parent=47 // pred_fallthru
          _
        %s1034 = sand.u32 %s197, 1
        %s1035 = scalar_lea.sflag [#allocation5], %s1034
        %s1036 = sand.u32 %s197, 1
        %s1037 = smul.addr %s1036, 8
        %s1038 = scalar_lea.vmem [#allocation8], %s1037
        // Predicated region
        $region65: #{tpu_custom_call.1} parent=47 // pred_check
          %p1039 = pneg %p207
        $region66: #{tpu_custom_call.1} parent=47 // pred_check_branch
          %1041 = sbr.rel (%p1039) target = $region68
        $region67: #{tpu_custom_call.1} parent=47 // pred_region
          %1043 = vsyncadd %s1035, 0
          %s1044 = smul.addr %s27, 8
          %s1045 = scalar_lea.hbm %s7, %s1044
          %s1047 = sshll.u32 %s1038, 4
          %s1048 = int_to_ptr.vmem [resolvable:$true] %s1047
          %s1049 = sshll.u32 %s1045, 4
          %s1050 = int_to_ptr.hbm [resolvable:$true] %s1049
          %1052 = dma.vmem_to_hbm [thread:$0]  %s1048, 128, %s1050, %s1035
        $region68: #{tpu_custom_call.1} parent=47 // pred_fallthru
          _
      $region48: #{tpu_custom_call.1} parent=5 // pred_fallthru
        _
      %p1053 = scmp.le.s32.totalorder 2, %s18
      // Predicated region
      $region69: #{tpu_custom_call.1} parent=5 // pred_check
        %p1054 = pneg %p1053
      $region70: #{tpu_custom_call.1} parent=5 // pred_check_branch
        %1056 = sbr.rel (%p1054) target = $region72
      $region71: #{tpu_custom_call.1} parent=5 // pred_region
        %s1057 = ssub.s32 %s18, 2
        // Predicated region
        $region73: #{tpu_custom_call.1} parent=71 // pred_check
          %p1058 = pneg %p213
        $region74: #{tpu_custom_call.1} parent=71 // pred_check_branch
          %1060 = sbr.rel (%p1058) target = $region76
        $region75: #{tpu_custom_call.1} parent=71 // pred_region
          %s1061 = sand.u32 %s198, 1
          %s1062 = scalar_lea.sflag [#allocation5], %s1061
          %s1063 = sand.u32 %s198, 1
          %s1064 = smul.addr %s1063, 8
          %s1065 = scalar_lea.vmem [#allocation8], %s1064
          %1067 = dma.done %s1062, 128
        $region76: #{tpu_custom_call.1} parent=71 // pred_fallthru
          _
      $region72: #{tpu_custom_call.1} parent=5 // pred_fallthru
        _
    $region6: #{tpu_custom_call.1} parent=1 // loop_footer
      %s22 = sadd.s32 1, %s18
    $region7: #{tpu_custom_call.1} parent=1 // loop_footer_branch
      %17 = sbr.rel target = $region3
    $region8: #{tpu_custom_call.1} parent=1 // loop_exit
      _
    %1068 = vsyncpa [#allocation4], 1
    %s1069 = scalar_lea.sflag [#allocation4], 1
    %1070 = vsyncpa %s1069, 1
    %1071 = vsyncpa [#allocation7], 1
    %1072 = vsyncpa [#allocation5], 1
    %s1073 = scalar_lea.sflag [#allocation5], 1
    %1074 = vsyncpa %s1073, 1

</llo_original>
